<compile_context>
chip_gen: v6e
topology: v6e:2x2x1
jax: 0.10.0
libtpu: 0.0.40
codegen_flags: <defaults>
</compile_context>

<pallas_src>
import functools

import jax
import jax.numpy as jnp
from jax import lax
from jax.experimental import pallas as pl
from jax.experimental.pallas import tpu as pltpu


def _block_kernel(xf_ref, w_ref, b_ref, gs_ref, sh_ref, o_ref, *, wp):
    """One batch element per grid step.

    xf_ref: (C, (H+3)*(W+2)) bf16  zero-padded NCHW input, spatial dims flattened
                                   (1 top / 2 bottom / 1 left / 1 right zero pad; the
                                   extra bottom rows only back reads that land in the
                                   throw-away pad columns).
    w_ref:  (3, Cout, 3*C)   bf16  conv taps regrouped per dx:
                                   w_ref[dx][o, dy*C + c] = weight[o, c, dy, dx]
    b_ref:  (Cout, 1)        f32   conv bias
    gs_ref: (Cout, 1)        f32   g * sqrt(Cout) * (scale + 1)   (per batch)
    sh_ref: (Cout, 1)        f32   shift                           (per batch)
    o_ref:  (Cout, H*(W+2))        channels-major output incl. 2 junk pad columns
    """
    cout, hw2 = o_ref.shape

    xf = xf_ref[...]                                     # (C, NCOL) bf16

    # 3x3 conv as 3 MXU matmuls with K = 3*C: per dx, stack the 3 dy-shifted row slabs
    # on the sublane axis so the dy accumulation is done by the MXU contraction.
    #   out[:, p] = sum_{dy,dx,c} W[o,c,dy,dx] * xf[c, p + dy*wp + dx]
    def dy_stack(dx):
        return jnp.concatenate(
            [xf[:, dy * wp + dx: dy * wp + dx + hw2] for dy in range(3)], axis=0)

    acc = jnp.dot(w_ref[0], dy_stack(0), preferred_element_type=jnp.float32)
    acc = acc + jnp.dot(w_ref[1], dy_stack(1), preferred_element_type=jnp.float32)
    acc = acc + jnp.dot(w_ref[2], dy_stack(2), preferred_element_type=jnp.float32)
    acc = acc + b_ref[...]

    # RMSNorm over channels (sublane reduce, XLU):
    #   x / max(||x||_2, 1e-12) * g * sqrt(Cout), with gain pre-folded into gs.
    ss = jnp.sum(acc * acc, axis=0, keepdims=True)       # (1, hw2)
    y = acc * lax.rsqrt(jnp.maximum(ss, 1e-24)) * gs_ref[...] + sh_ref[...]

    # SiLU. Sigmoid in bf16 doubles EUP throughput on v6e/v7x; junk pad columns never
    # leak into valid outputs (the norm is per column).
    # TODO(synk): keep the sigmoid in f32 on v5e (its EUP has no bf16 path).
    y = y * jax.nn.sigmoid(y.astype(jnp.bfloat16)).astype(jnp.float32)

    o_ref[...] = y.astype(o_ref.dtype)


def block_forward(x_nchw, weight, bias, g, scale=None, shift=None,
                  *, out_dtype=jnp.float32, return_padded=False):
    """Pallas forward pass.

    x_nchw: (B, C, H, W)
    weight: (Cout, C, 3, 3)  torch Conv2d OIHW layout
    bias:   (Cout,)
    g:      (Cout,)          (torch stores as (1, Cout, 1, 1))
    scale/shift: optional (B, Cout), broadcast over spatial dims
    out_dtype: use jnp.bfloat16 to halve output HBM writeback (main win on v5e).
    return_padded: return (B, Cout, H, W+2) with 2 junk columns and no extra HBM slice
                   pass (fused consumers drop them); default returns (B, Cout, H, W).
    """
    B, C, H, W = x_nchw.shape
    Cout = weight.shape[0]
    Wp = W + 2
    HW2 = H * Wp
    NCOL = (H + 3) * Wp   # 1 top + 2 bottom pad rows keep every shifted tap window in-bounds

    # Zero-pad + bf16 cast.  allow_input_fusion on this operand lets XLA fuse the
    # pad/cast into the kernel's input DMA instead of writing a padded copy to HBM.
    xp = jnp.pad(x_nchw.astype(jnp.bfloat16), ((0, 0), (0, 0), (1, 2), (1, 1)))
    xf = xp.reshape(B, C, NCOL)                      # contiguous -> metadata reshape

    # (Cout, C, 3, 3) -> (3_dx, Cout, 3_dy * C):  w3[dx][o, dy*C + c] = weight[o, c, dy, dx]
    w3 = jnp.transpose(weight, (3, 0, 2, 1)).reshape(3, Cout, 3 * C).astype(jnp.bfloat16)

    b2 = bias.reshape(Cout, 1).astype(jnp.float32)
    if scale is None:
        scale = jnp.zeros((B, Cout), jnp.float32)
    if shift is None:
        shift = jnp.zeros((B, Cout), jnp.float32)
    # Fold the RMSNorm gain (and sqrt(Cout)) into the per-batch modulation scale:
    # removes one full (Cout, HW2) VPU multiply from the epilogue.
    gs = (g.reshape(1, Cout).astype(jnp.float32) * (Cout ** 0.5)
          * (scale.astype(jnp.float32) + 1.0)).reshape(B, Cout, 1)
    sh = shift.astype(jnp.float32).reshape(B, Cout, 1)

    kernel = functools.partial(_block_kernel, wp=Wp)

    out_flat = pl.pallas_call(
        kernel,
        out_shape=jax.ShapeDtypeStruct((B, Cout, HW2), out_dtype),
        grid=(B,),
        in_specs=[
            pl.BlockSpec((None, C, NCOL), lambda b: (b, 0, 0)),
            # grid-invariant operands: single-buffered (no double-buffer VMEM cost).
            pl.BlockSpec((3, Cout, 3 * C), lambda b: (0, 0, 0),
                         pipeline_mode=pl.Buffered(1)),
            pl.BlockSpec((Cout, 1), lambda b: (0, 0),
                         pipeline_mode=pl.Buffered(1)),
            pl.BlockSpec((None, Cout, 1), lambda b: (b, 0, 0)),
            pl.BlockSpec((None, Cout, 1), lambda b: (b, 0, 0)),
        ],
        out_specs=pl.BlockSpec((None, Cout, HW2), lambda b: (b, 0, 0)),
        compiler_params=pltpu.CompilerParams(
            dimension_semantics=("parallel",),
            vmem_limit_bytes=48 * 1024 * 1024,
            allow_input_fusion=[True, False, False, False, False],
        ),
    )(xf, w3, b2, gs, sh)

    # (B, Cout, H*(W+2)) -> (B, Cout, H, W+2) is a metadata reshape.
    out = out_flat.reshape(B, Cout, H, Wp)
    if return_padded:
        return out
    return out[:, :, :, :W]


def block_reference(x, weight, bias, g, scale=None, shift=None):
    """Pure-JAX reference matching the PyTorch semantics (NCHW, f32)."""
    y = lax.conv_general_dilated(
        x, weight, window_strides=(1, 1), padding=((1, 1), (1, 1)),
        dimension_numbers=("NCHW", "OIHW", "NCHW"))
    y = y + bias.reshape(1, -1, 1, 1)
    l2 = jnp.sqrt(jnp.sum(y * y, axis=1, keepdims=True))
    y = y / jnp.maximum(l2, 1e-12) * g.reshape(1, -1, 1, 1) * (y.shape[1] ** 0.5)
    if scale is not None:
        y = y * (scale[:, :, None, None] + 1.0) + shift[:, :, None, None]
    return y * jax.nn.sigmoid(y)


if __name__ == "__main__":
    B, C, Cout, H, W = 2, 4, 8, 16, 16

    key = jax.random.PRNGKey(0)
    kx, kw, kb, kg, ks, kh = jax.random.split(key, 6)

    x = jax.random.normal(kx, (B, C, H, W), jnp.float32)
    weight = jax.random.normal(kw, (Cout, C, 3, 3), jnp.float32) * 0.1
    bias = jax.random.normal(kb, (Cout,), jnp.float32) * 0.1
    g = jnp.ones((Cout,), jnp.float32) + 0.05 * jax.random.normal(kg, (Cout,), jnp.float32)
    scale = 0.1 * jax.random.normal(ks, (B, Cout), jnp.float32)
    shift = 0.1 * jax.random.normal(kh, (B, Cout), jnp.float32)

    out = block_forward(x, weight, bias, g, scale, shift)
    out = jax.block_until_ready(out)

    ref = block_reference(x, weight, bias, g, scale, shift)
    assert out.shape == (B, Cout, H, W)
    # bf16 MXU operands / bf16 sigmoid (f32 accumulate + epilogue) -> loose tolerance.
    assert jnp.allclose(out, ref, atol=3e-2, rtol=3e-2), "mismatch vs reference"

    print("KERNEL_OK")
</pallas_src>

<mosaic_0001>
module attributes {stable_mosaic.version = 11 : i64} {
  func.func @_block_kernel(%arg0: i32, %arg1: memref<1x4x342xbf16, #tpu.memory_space<vmem>>, %arg2: memref<3x8x12xbf16, #tpu.memory_space<vmem>>, %arg3: memref<8x1xf32, #tpu.memory_space<vmem>>, %arg4: memref<1x8x1xf32, #tpu.memory_space<vmem>>, %arg5: memref<1x8x1xf32, #tpu.memory_space<vmem>>, %arg6: memref<1x8x288xf32, #tpu.memory_space<vmem>>) attributes {dimension_semantics = [#tpu.dimension_semantics<parallel>], iteration_bounds = array<i64: 2>, scalar_prefetch = 0 : i64, scratch_operands = 0 : i64, tpu.core_type = #tpu.core_type<tc>, window_params = [{transform_indices = @transform_0, window_bounds = array<i64: 1, 4, 342>}, {pipeline_mode = #tpu.pipeline_mode<synchronous>, transform_indices = @transform_1, window_bounds = array<i64: 3, 8, 12>}, {pipeline_mode = #tpu.pipeline_mode<synchronous>, transform_indices = @transform_2, window_bounds = array<i64: 8, 1>}, {transform_indices = @transform_3, window_bounds = array<i64: 1, 8, 1>}, {transform_indices = @transform_4, window_bounds = array<i64: 1, 8, 1>}, {transform_indices = @transform_5, window_bounds = array<i64: 1, 8, 288>}]} {
    %c0 = arith.constant 0 : index
    %c0_0 = arith.constant 0 : index
    %c0_1 = arith.constant 0 : index
    %0 = vector.load %arg1[%c0, %c0_0, %c0_1] : memref<1x4x342xbf16, #tpu.memory_space<vmem>>, vector<1x4x342xbf16>
    %1 = vector.shape_cast %0 : vector<1x4x342xbf16> to vector<4x342xbf16>
    %c0_2 = arith.constant 0 : index
    %c0_3 = arith.constant 0 : index
    %c0_4 = arith.constant 0 : index
    %2 = vector.load %arg2[%c0_2, %c0_3, %c0_4] : memref<3x8x12xbf16, #tpu.memory_space<vmem>>, vector<1x8x12xbf16>
    %3 = vector.shape_cast %2 : vector<1x8x12xbf16> to vector<8x12xbf16>
    %4 = vector.extract_strided_slice %1 {offsets = [0, 0], sizes = [4, 288], strides = [1, 1]} : vector<4x342xbf16> to vector<4x288xbf16>
    %5 = vector.extract_strided_slice %1 {offsets = [0, 18], sizes = [4, 288], strides = [1, 1]} : vector<4x342xbf16> to vector<4x288xbf16>
    %6 = vector.extract_strided_slice %1 {offsets = [0, 36], sizes = [4, 288], strides = [1, 1]} : vector<4x342xbf16> to vector<4x288xbf16>
    %7 = tpu.concatenate %4, %5, %6 in 0 : vector<4x288xbf16>, vector<4x288xbf16>, vector<4x288xbf16> -> vector<12x288xbf16>
    %cst = arith.constant dense<0.000000e+00> : vector<8x288xf32>
    %8 = tpu.matmul %3, %7, %cst {dimension_numbers = #tpu.dot_dimension_numbers<[1], [0], [0], [1], [0, 0, 1, 1], [], []>} : vector<8x12xbf16>, vector<12x288xbf16>, vector<8x288xf32> -> vector<8x288xf32>
    %c1 = arith.constant 1 : index
    %c0_5 = arith.constant 0 : index
    %c0_6 = arith.constant 0 : index
    %9 = vector.load %arg2[%c1, %c0_5, %c0_6] : memref<3x8x12xbf16, #tpu.memory_space<vmem>>, vector<1x8x12xbf16>
    %10 = vector.shape_cast %9 : vector<1x8x12xbf16> to vector<8x12xbf16>
    %11 = vector.extract_strided_slice %1 {offsets = [0, 1], sizes = [4, 288], strides = [1, 1]} : vector<4x342xbf16> to vector<4x288xbf16>
    %12 = vector.extract_strided_slice %1 {offsets = [0, 19], sizes = [4, 288], strides = [1, 1]} : vector<4x342xbf16> to vector<4x288xbf16>
    %13 = vector.extract_strided_slice %1 {offsets = [0, 37], sizes = [4, 288], strides = [1, 1]} : vector<4x342xbf16> to vector<4x288xbf16>
    %14 = tpu.concatenate %11, %12, %13 in 0 : vector<4x288xbf16>, vector<4x288xbf16>, vector<4x288xbf16> -> vector<12x288xbf16>
    %cst_7 = arith.constant dense<0.000000e+00> : vector<8x288xf32>
    %15 = tpu.matmul %10, %14, %cst_7 {dimension_numbers = #tpu.dot_dimension_numbers<[1], [0], [0], [1], [0, 0, 1, 1], [], []>} : vector<8x12xbf16>, vector<12x288xbf16>, vector<8x288xf32> -> vector<8x288xf32>
    %16 = arith.addf %8, %15 : vector<8x288xf32>
    %c2 = arith.constant 2 : index
    %c0_8 = arith.constant 0 : index
    %c0_9 = arith.constant 0 : index
    %17 = vector.load %arg2[%c2, %c0_8, %c0_9] : memref<3x8x12xbf16, #tpu.memory_space<vmem>>, vector<1x8x12xbf16>
    %18 = vector.shape_cast %17 : vector<1x8x12xbf16> to vector<8x12xbf16>
    %19 = vector.extract_strided_slice %1 {offsets = [0, 2], sizes = [4, 288], strides = [1, 1]} : vector<4x342xbf16> to vector<4x288xbf16>
    %20 = vector.extract_strided_slice %1 {offsets = [0, 20], sizes = [4, 288], strides = [1, 1]} : vector<4x342xbf16> to vector<4x288xbf16>
    %21 = vector.extract_strided_slice %1 {offsets = [0, 38], sizes = [4, 288], strides = [1, 1]} : vector<4x342xbf16> to vector<4x288xbf16>
    %22 = tpu.concatenate %19, %20, %21 in 0 : vector<4x288xbf16>, vector<4x288xbf16>, vector<4x288xbf16> -> vector<12x288xbf16>
    %cst_10 = arith.constant dense<0.000000e+00> : vector<8x288xf32>
    %23 = tpu.matmul %18, %22, %cst_10 {dimension_numbers = #tpu.dot_dimension_numbers<[1], [0], [0], [1], [0, 0, 1, 1], [], []>} : vector<8x12xbf16>, vector<12x288xbf16>, vector<8x288xf32> -> vector<8x288xf32>
    %24 = arith.addf %16, %23 : vector<8x288xf32>
    %c0_11 = arith.constant 0 : index
    %c0_12 = arith.constant 0 : index
    %25 = vector.load %arg3[%c0_11, %c0_12] : memref<8x1xf32, #tpu.memory_space<vmem>>, vector<8x1xf32>
    %26 = vector.broadcast %25 : vector<8x1xf32> to vector<8x288xf32>
    %27 = arith.addf %24, %26 : vector<8x288xf32>
    %28 = arith.mulf %27, %27 : vector<8x288xf32>
    %cst_13 = arith.constant dense<0.000000e+00> : vector<288xf32>
    %29 = vector.multi_reduction <add>, %28, %cst_13 [0] : vector<8x288xf32> to vector<288xf32>
    %30 = vector.shape_cast %29 : vector<288xf32> to vector<1x288xf32>
    %cst_14 = arith.constant 1.000000e-24 : f32
    %31 = vector.broadcast %cst_14 : f32 to vector<1x288xf32>
    %32 = arith.maximumf %30, %31 : vector<1x288xf32>
    %33 = math.rsqrt %32 : vector<1x288xf32>
    %34 = vector.broadcast %33 : vector<1x288xf32> to vector<8x288xf32>
    %35 = arith.mulf %27, %34 : vector<8x288xf32>
    %c0_15 = arith.constant 0 : index
    %c0_16 = arith.constant 0 : index
    %c0_17 = arith.constant 0 : index
    %36 = vector.load %arg4[%c0_15, %c0_16, %c0_17] : memref<1x8x1xf32, #tpu.memory_space<vmem>>, vector<1x8x1xf32>
    %37 = vector.shape_cast %36 : vector<1x8x1xf32> to vector<8x1xf32>
    %38 = vector.broadcast %37 : vector<8x1xf32> to vector<8x288xf32>
    %39 = arith.mulf %35, %38 : vector<8x288xf32>
    %c0_18 = arith.constant 0 : index
    %c0_19 = arith.constant 0 : index
    %c0_20 = arith.constant 0 : index
    %40 = vector.load %arg5[%c0_18, %c0_19, %c0_20] : memref<1x8x1xf32, #tpu.memory_space<vmem>>, vector<1x8x1xf32>
    %41 = vector.shape_cast %40 : vector<1x8x1xf32> to vector<8x1xf32>
    %42 = vector.broadcast %41 : vector<8x1xf32> to vector<8x288xf32>
    %43 = arith.addf %39, %42 : vector<8x288xf32>
    %44 = arith.truncf %43 : vector<8x288xf32> to vector<8x288xbf16>
    %45 = arith.negf %44 : vector<8x288xbf16>
    %46 = math.exp %45 : vector<8x288xbf16>
    %cst_21 = arith.constant 1.000000e+00 : bf16
    %47 = vector.broadcast %cst_21 : bf16 to vector<8x288xbf16>
    %48 = arith.addf %47, %46 : vector<8x288xbf16>
    %49 = arith.divf %47, %48 : vector<8x288xbf16>
    %50 = arith.extf %49 : vector<8x288xbf16> to vector<8x288xf32>
    %51 = arith.mulf %43, %50 : vector<8x288xf32>
    %c0_22 = arith.constant 0 : index
    %c0_23 = arith.constant 0 : index
    %c0_24 = arith.constant 0 : index
    %52 = vector.load %arg6[%c0_22, %c0_23, %c0_24] : memref<1x8x288xf32, #tpu.memory_space<vmem>>, vector<1x8x288xf32>
    %53 = vector.shape_cast %52 : vector<1x8x288xf32> to vector<8x288xf32>
    %54 = vector.shape_cast %51 : vector<8x288xf32> to vector<1x8x288xf32>
    tpu.vector_store %arg6[%c0_22, %c0_23, %c0_24], %54 {strides = array<i32>} : memref<1x8x288xf32, #tpu.memory_space<vmem>>, vector<1x8x288xf32>,
    return
  }
  func.func @transform_0(%arg0: i32) -> (i32, i32, i32) {
    %c0_i32 = arith.constant 0 : i32
    %c0_i32_0 = arith.constant 0 : i32
    %c0_i32_1 = arith.constant 0 : i32
    return %arg0, %c0_i32, %c0_i32_0 : i32, i32, i32
  }
  func.func @transform_1(%arg0: i32) -> (i32, i32, i32) {
    %c0_i32 = arith.constant 0 : i32
    %c0_i32_0 = arith.constant 0 : i32
    %c0_i32_1 = arith.constant 0 : i32
    %c0_i32_2 = arith.constant 0 : i32
    return %c0_i32, %c0_i32_0, %c0_i32_1 : i32, i32, i32
  }
  func.func @transform_2(%arg0: i32) -> (i32, i32) {
    %c0_i32 = arith.constant 0 : i32
    %c0_i32_0 = arith.constant 0 : i32
    %c0_i32_1 = arith.constant 0 : i32
    return %c0_i32, %c0_i32_0 : i32, i32
  }
  func.func @transform_3(%arg0: i32) -> (i32, i32, i32) {
    %c0_i32 = arith.constant 0 : i32
    %c0_i32_0 = arith.constant 0 : i32
    %c0_i32_1 = arith.constant 0 : i32
    return %arg0, %c0_i32, %c0_i32_0 : i32, i32, i32
  }
  func.func @transform_4(%arg0: i32) -> (i32, i32, i32) {
    %c0_i32 = arith.constant 0 : i32
    %c0_i32_0 = arith.constant 0 : i32
    %c0_i32_1 = arith.constant 0 : i32
    return %arg0, %c0_i32, %c0_i32_0 : i32, i32, i32
  }
  func.func @transform_5(%arg0: i32) -> (i32, i32, i32) {
    %c0_i32 = arith.constant 0 : i32
    %c0_i32_0 = arith.constant 0 : i32
    %c0_i32_1 = arith.constant 0 : i32
    return %arg0, %c0_i32, %c0_i32_0 : i32, i32, i32
  }
}

</mosaic_0001>

<llo_original>
// kernel: tpu_custom_call.1
$region0: #{tpu_custom_call.1}
  #allocation0 [shape = 'u32[]', space=smem, size = 0x4, offset = 0x4, fixed_abs, tag = 'smem constant byte address 0x4 - core index']
  #allocation1 [shape = 'u32[144,128]{1,0:T(1,128)}', space=vmem, size = 0x12000, scoped, tag = 'internal scratch']
  %s0 = inlined_call_operand.vmem [shape: bf16[2,4,342], index: 0, kind: input, shape index: {}]
  %s1 = inlined_call_operand.vmem [shape: bf16[3,8,12], index: 1, kind: input, shape index: {}]
  %s2 = inlined_call_operand.vmem [shape: f32[8,1], index: 2, kind: input, shape index: {}]
  %s3 = inlined_call_operand.vmem [shape: f32[2,8,1], index: 3, kind: input, shape index: {}]
  %s4 = inlined_call_operand.vmem [shape: f32[2,8,1], index: 4, kind: input, shape index: {}]
  %s5 = inlined_call_operand.hbm [shape: f32[2,8,288], index: 5, kind: output, shape index: {}]
  %s6 = sld [smem:[#allocation0]]
  $region53: #{tpu_custom_call.1} parent=0
    _
  %s8 = ssub.s32 1, %s6
  %s9 = scalar_select 0, %s8, %s6
  $region1: #{tpu_custom_call.1} parent=0
    #allocation2 [shape = 'u8[24576]{0}', space=vmem, size = 0x6000, scoped, tag = 'output window, operand 0']
    #allocation3 [shape = 's32[2]{0}', space=sflag, size = 0x8, scoped, tag = 'scoped memory for tpu_custom_call.1']
    %10 = vsyncpa [#allocation3], 0
    %s11 = scalar_lea.sflag [#allocation3], 1
    %12 = vsyncpa %s11, 0
    loop: start=0, step=1, limit=4
    $region2: #{tpu_custom_call.1} parent=1 // loop_pre_header
      _
    $region3: #{tpu_custom_call.1} parent=1 // loop_header
      %s14 = sphi 0, %s18
      %p15 = scmp.ge.s32.totalorder %s14, 4
      %s24 = sphi 0, %s26
      %s27 = sphi 0, %s24
      %s28 = sphi 0, %s27
      %s44 = sphi 0, %s28
      %s48 = sphi 0, %s48
      %s50 = sphi 0, %s48
      %s51 = sphi 0, %s50
      %s65 = sphi 0, %s51
      %s69 = sphi 0, %s69
      %s71 = sphi 0, %s69
      %s72 = sphi 0, %s71
      %s86 = sphi 0, %s72
      %s92 = sphi 0, %s94
      %s95 = sphi 0, %s92
      %s96 = sphi 0, %s95
      %s112 = sphi 0, %s96
      %s118 = sphi 0, %s120
      %s121 = sphi 0, %s118
      %s122 = sphi 0, %s121
      %s138 = sphi 0, %s122
      %s144 = sphi 0, %s146
      %s147 = sphi 0, %s144
      %s148 = sphi 0, %s147
      %s164 = sphi 0, %s148
    $region4: #{tpu_custom_call.1} parent=1 // loop_header_branch
      %17 = sbr.rel (%p15) target = $region8
    $region5: #{tpu_custom_call.1} parent=1 // loop_body
      %s19 = ssub.s32 %s14, 1
      %s20 = ssub.s32 %s14, 2
      %s21 = sadd.s32 %s14, 1
      %s22 = ssub.s32 %s14, %s21
      %p23 = scmp.eq.s32.totalorder %s22, 0
      %s25 = sadd.s32 %s24, 1
      %s26 = scalar_select %p23, %s24, %s25
      %p29 = pneg %p23
      %p30 = scmp.eq.s32.totalorder %s14, 1
      %p31 = por %p29, %p30
      %p32 = scmp.ne.s32.totalorder %s24, %s27
      %p33 = scmp.eq.s32.totalorder %s14, 0
      %p34 = por %p32, %p33
      %p35 = scmp.ne.s32.totalorder %s24, %s27
      %p36 = scmp.eq.s32.totalorder %s19, 1
      %p37 = por %p35, %p36
      %p38 = scmp.ne.s32.totalorder %s27, %s28
      %p39 = scmp.eq.s32.totalorder %s19, 0
      %p40 = por %p38, %p39
      %p41 = scmp.ne.s32.totalorder %s27, %s28
      %p42 = scmp.eq.s32.totalorder %s20, 1
      %p43 = por %p41, %p42
      %p45 = scmp.ne.s32.totalorder %s28, %s44
      %p46 = scmp.eq.s32.totalorder %s20, 0
      %p47 = por %p45, %p46
      %s49 = sadd.s32 %s48, 1
      %p52 = scmp.eq.s32.totalorder %s14, 1
      %p53 = scmp.ne.s32.totalorder %s48, %s50
      %p54 = scmp.eq.s32.totalorder %s14, 0
      %p55 = por %p53, %p54
      %p56 = scmp.ne.s32.totalorder %s48, %s50
      %p57 = scmp.eq.s32.totalorder %s19, 1
      %p58 = por %p56, %p57
      %p59 = scmp.ne.s32.totalorder %s50, %s51
      %p60 = scmp.eq.s32.totalorder %s19, 0
      %p61 = por %p59, %p60
      %p62 = scmp.ne.s32.totalorder %s50, %s51
      %p63 = scmp.eq.s32.totalorder %s20, 1
      %p64 = por %p62, %p63
      %p66 = scmp.ne.s32.totalorder %s51, %s65
      %p67 = scmp.eq.s32.totalorder %s20, 0
      %p68 = por %p66, %p67
      %s70 = sadd.s32 %s69, 1
      %p73 = scmp.eq.s32.totalorder %s14, 1
      %p74 = scmp.ne.s32.totalorder %s69, %s71
      %p75 = scmp.eq.s32.totalorder %s14, 0
      %p76 = por %p74, %p75
      %p77 = scmp.ne.s32.totalorder %s69, %s71
      %p78 = scmp.eq.s32.totalorder %s19, 1
      %p79 = por %p77, %p78
      %p80 = scmp.ne.s32.totalorder %s71, %s72
      %p81 = scmp.eq.s32.totalorder %s19, 0
      %p82 = por %p80, %p81
      %p83 = scmp.ne.s32.totalorder %s71, %s72
      %p84 = scmp.eq.s32.totalorder %s20, 1
      %p85 = por %p83, %p84
      %p87 = scmp.ne.s32.totalorder %s72, %s86
      %p88 = scmp.eq.s32.totalorder %s20, 0
      %p89 = por %p87, %p88
      %s90 = ssub.s32 %s14, %s21
      %p91 = scmp.eq.s32.totalorder %s90, 0
      %s93 = sadd.s32 %s92, 1
      %s94 = scalar_select %p91, %s92, %s93
      %p97 = pneg %p91
      %p98 = scmp.eq.s32.totalorder %s14, 1
      %p99 = por %p97, %p98
      %p100 = scmp.ne.s32.totalorder %s92, %s95
      %p101 = scmp.eq.s32.totalorder %s14, 0
      %p102 = por %p100, %p101
      %p103 = scmp.ne.s32.totalorder %s92, %s95
      %p104 = scmp.eq.s32.totalorder %s19, 1
      %p105 = por %p103, %p104
      %p106 = scmp.ne.s32.totalorder %s95, %s96
      %p107 = scmp.eq.s32.totalorder %s19, 0
      %p108 = por %p106, %p107
      %p109 = scmp.ne.s32.totalorder %s95, %s96
      %p110 = scmp.eq.s32.totalorder %s20, 1
      %p111 = por %p109, %p110
      %p113 = scmp.ne.s32.totalorder %s96, %s112
      %p114 = scmp.eq.s32.totalorder %s20, 0
      %p115 = por %p113, %p114
      %s116 = ssub.s32 %s14, %s21
      %p117 = scmp.eq.s32.totalorder %s116, 0
      %s119 = sadd.s32 %s118, 1
      %s120 = scalar_select %p117, %s118, %s119
      %p123 = pneg %p117
      %p124 = scmp.eq.s32.totalorder %s14, 1
      %p125 = por %p123, %p124
      %p126 = scmp.ne.s32.totalorder %s118, %s121
      %p127 = scmp.eq.s32.totalorder %s14, 0
      %p128 = por %p126, %p127
      %p129 = scmp.ne.s32.totalorder %s118, %s121
      %p130 = scmp.eq.s32.totalorder %s19, 1
      %p131 = por %p129, %p130
      %p132 = scmp.ne.s32.totalorder %s121, %s122
      %p133 = scmp.eq.s32.totalorder %s19, 0
      %p134 = por %p132, %p133
      %p135 = scmp.ne.s32.totalorder %s121, %s122
      %p136 = scmp.eq.s32.totalorder %s20, 1
      %p137 = por %p135, %p136
      %p139 = scmp.ne.s32.totalorder %s122, %s138
      %p140 = scmp.eq.s32.totalorder %s20, 0
      %p141 = por %p139, %p140
      %s142 = ssub.s32 %s14, %s21
      %p143 = scmp.eq.s32.totalorder %s142, 0
      %s145 = sadd.s32 %s144, 1
      %s146 = scalar_select %p143, %s144, %s145
      %p149 = pneg %p143
      %p150 = scmp.eq.s32.totalorder %s14, 1
      %p151 = por %p149, %p150
      %p152 = scmp.ne.s32.totalorder %s144, %s147
      %p153 = scmp.eq.s32.totalorder %s14, 0
      %p154 = por %p152, %p153
      %p155 = scmp.ne.s32.totalorder %s144, %s147
      %p156 = scmp.eq.s32.totalorder %s19, 1
      %p157 = por %p155, %p156
      %p158 = scmp.ne.s32.totalorder %s147, %s148
      %p159 = scmp.eq.s32.totalorder %s19, 0
      %p160 = por %p158, %p159
      %p161 = scmp.ne.s32.totalorder %s147, %s148
      %p162 = scmp.eq.s32.totalorder %s20, 1
      %p163 = por %p161, %p162
      %p165 = scmp.ne.s32.totalorder %s148, %s164
      %p166 = scmp.eq.s32.totalorder %s20, 0
      %p167 = por %p165, %p166
      %p168 = scmp.le.s32.totalorder 1, %s14
      %p169 = scmp.lt.s32.totalorder %s14, 3
      %p170 = pnand %p168, %p169
      %p171 = pneg %p170
      // Predicated region
      $region9: #{tpu_custom_call.1} parent=5 // pred_check
        _
      $region10: #{tpu_custom_call.1} parent=5 // pred_check_branch
        %173 = sbr.rel (%p170) target = $region12
      $region11: #{tpu_custom_call.1} parent=5 // pred_region
        %s174 = ssub.s32 %s14, 1
        // Predicated region
        $region13: #{tpu_custom_call.1} parent=11 // pred_check
          %p175 = pneg %p61
        $region14: #{tpu_custom_call.1} parent=11 // pred_check_branch
          %177 = sbr.rel (%p175) target = $region16
        $region15: #{tpu_custom_call.1} parent=11 // pred_region
          _
        $region16: #{tpu_custom_call.1} parent=11 // pred_fallthru
          _
        // Predicated region
        $region17: #{tpu_custom_call.1} parent=11 // pred_check
          %p178 = pneg %p82
        $region18: #{tpu_custom_call.1} parent=11 // pred_check_branch
          %180 = sbr.rel (%p178) target = $region20
        $region19: #{tpu_custom_call.1} parent=11 // pred_region
          _
        $region20: #{tpu_custom_call.1} parent=11 // pred_fallthru
          _
      $region12: #{tpu_custom_call.1} parent=5 // pred_fallthru
        _
      %p181 = scmp.lt.s32.totalorder %s14, 2
      // Predicated region
      $region21: #{tpu_custom_call.1} parent=5 // pred_check
        %p182 = pneg %p181
      $region22: #{tpu_custom_call.1} parent=5 // pred_check_branch
        %184 = sbr.rel (%p182) target = $region24
      $region23: #{tpu_custom_call.1} parent=5 // pred_region
        // Predicated region
        $region25: #{tpu_custom_call.1} parent=23 // pred_check
          %p185 = pneg %p34
        $region26: #{tpu_custom_call.1} parent=23 // pred_check_branch
          %187 = sbr.rel (%p185) target = $region28
        $region27: #{tpu_custom_call.1} parent=23 // pred_region
          %p188 = scmp.lt.s32.totalorder %s14, 1
          %s189 = scalar_select %p188, %s14, 1
          %s190 = smul.addr %s189, 3
          %s191 = smul.addr %s190, 2
          %s192 = scalar_lea.vmem %s0, %s191
        $region28: #{tpu_custom_call.1} parent=23 // pred_fallthru
          _
        // Predicated region
        $region29: #{tpu_custom_call.1} parent=23 // pred_check
          %p193 = pneg %p102
        $region30: #{tpu_custom_call.1} parent=23 // pred_check_branch
          %195 = sbr.rel (%p193) target = $region32
        $region31: #{tpu_custom_call.1} parent=23 // pred_region
          %p196 = scmp.lt.s32.totalorder %s14, 1
          %s197 = scalar_select %p196, %s14, 1
          %s198 = smul.addr %s197, 8
          %s199 = scalar_lea.vmem %s3, %s198
        $region32: #{tpu_custom_call.1} parent=23 // pred_fallthru
          _
        // Predicated region
        $region33: #{tpu_custom_call.1} parent=23 // pred_check
          %p200 = pneg %p128
        $region34: #{tpu_custom_call.1} parent=23 // pred_check_branch
          %202 = sbr.rel (%p200) target = $region36
        $region35: #{tpu_custom_call.1} parent=23 // pred_region
          %p203 = scmp.lt.s32.totalorder %s14, 1
          %s204 = scalar_select %p203, %s14, 1
          %s205 = smul.addr %s204, 8
          %s206 = scalar_lea.vmem %s4, %s205
        $region36: #{tpu_custom_call.1} parent=23 // pred_fallthru
          _
      $region24: #{tpu_custom_call.1} parent=5 // pred_fallthru
        _
      %p207 = scmp.le.s32.totalorder 1, %s14
      %p208 = scmp.lt.s32.totalorder %s14, 3
      %p209 = pnand %p207, %p208
      %p210 = pneg %p209
      // Predicated region
      $region37: #{tpu_custom_call.1} parent=5 // pred_check
        _
      $region38: #{tpu_custom_call.1} parent=5 // pred_check_branch
        %212 = sbr.rel (%p209) target = $region40
      $region39: #{tpu_custom_call.1} parent=5 // pred_region
        %s213 = ssub.s32 %s14, 1
        %p214 = scmp.lt.s32.totalorder %s19, 1
        %s215 = scalar_select %p214, %s19, 1
        %s216 = smul.addr %s215, 3
        %s217 = smul.addr %s216, 2
        %s218 = scalar_lea.vmem %s0, %s217
        %p219 = pneg %p40
        %p220 = pneg %p37
        %p221 = pneg %p61
        %p222 = pneg %p58
        %p223 = pneg %p82
        %p224 = pneg %p79
        %p225 = scmp.lt.s32.totalorder %s19, 1
        %s226 = scalar_select %p225, %s19, 1
        %s227 = smul.addr %s226, 8
        %s228 = scalar_lea.vmem %s3, %s227
        %p229 = pneg %p108
        %p230 = pneg %p105
        %p231 = scmp.lt.s32.totalorder %s19, 1
        %s232 = scalar_select %p231, %s19, 1
        %s233 = smul.addr %s232, 8
        %s234 = scalar_lea.vmem %s4, %s233
        %p235 = pneg %p134
        %p236 = pneg %p131
        %p237 = pneg %p160
        %p238 = pneg %p157
        %s239 = sand.u32 %s147, 1
        %s240 = scalar_lea.sflag [#allocation3], %s239
        %s241 = sand.u32 %s147, 1
        %s242 = smul.addr %s241, 24
        %s243 = scalar_lea.vmem [#allocation2], %s242
        %p244 = scmp.lt.s32.totalorder %s19, 1
        %s245 = scalar_select %p244, %s19, 1
        %s246 = smul.addr %s245, 3
        %s247 = smul.addr %s246, 2
        %s248 = scalar_lea.vmem %s0, %s247
        %p249 = scmp.lt.s32.totalorder %s19, 1
        %s250 = scalar_select %p249, %s19, 1
        %s251 = smul.addr %s250, 8
        %s252 = scalar_lea.vmem %s3, %s251
        %p253 = scmp.lt.s32.totalorder %s19, 1
        %s254 = scalar_select %p253, %s19, 1
        %s255 = smul.addr %s254, 8
        %s256 = scalar_lea.vmem %s4, %s255
        %v259 = vld [vmem:[%s248] sm:$0x3f]
        %v260 = vld [vmem:[%s1] sm:$0xf]
        %v262 = vcombine.high %v259, %v259
        %v264 = vunpack.c.l.s4 1983009808
        %v265 = vunpack.c.0.s8 %v264
        %v266 = vlaneseq
        %v267 = vshrl.u32 %v266, 7
        %v268 = vsub.s32 %v265, %v267
        %v269 = vrot.slane %v259, %v268
        %v271 = vunpack.c.l.s4 1983009808
        %v272 = vunpack.c.0.s8 %v271
        %v273 = vlaneseq
        %v274 = vshrl.u32 %v273, 7
        %v275 = vsub.s32 %v272, %v274
        %v276 = vrot.slane %v262, %v275
        %v277 = vcombine.high %v269, %v269
        %v278 = vcombine.low %v259, %v259
        %v280 = vunpack.c.l.s4 1983009808
        %v281 = vunpack.c.0.s8 %v280
        %v282 = vlaneseq
        %v283 = vshrl.u32 %v282, 7
        %v284 = vsub.s32 %v281, %v283
        %v285 = vrot.slane %v278, %v284
        %v286 = vcombine.high %v285, %v285
        %287 = vrot.lane.b32.xlu0 %v285, 110
        %v288 = vpop.permute.xlu0 %287
        %289 = vrot.lane.b32.xlu0 %v286, 110
        %v290 = vpop.permute.xlu0 %289
        %291 = vrot.lane.b32.xlu0 %v269, 110
        %v292 = vpop.permute.xlu0 %291
        %vm293 = vcmask 900096
        %v294 = vsel %vm293, %v288, %v290
        %v295 = vsel %vm293, %v290, %v292
        %v296 = vcombine.low %v269, %v269
        %v297 = vcombine.low %v276, %v276
        %298 = vrot.lane.b32.xlu0 %v296, 92
        %v299 = vpop.permute.xlu0 %298
        %300 = vrot.lane.b32.xlu0 %v269, 92
        %v301 = vpop.permute.xlu0 %300
        %302 = vrot.lane.b32.xlu0 %v297, 92
        %v303 = vpop.permute.xlu0 %302
        %vm304 = vcmask 752640
        %v305 = vsel %vm304, %v299, %v301
        %v306 = vsel %vm304, %v301, %v303
        %vm307 = vcmask 1041408
        %v310 = vsel %vm307, %v269, %v294
        %v313 = vsel %vm307, %v277, %v295
        %v316 = vsel %vm307, %v276, %v292
        %vm317 = vcmask 1043456
        %v319 = vsel %vm317, %v310, %v305
        %v321 = vsel %vm317, %v313, %v306
        %v323 = vsel %vm317, %v316, %v303
        %s324 = scalar_lea.vmem %s1, 4
        %v325 = vld [vmem:[%s324] sm:$0xf]
        %329 = vrot.lane.b32.xlu0 %v319, 127
        %v330 = vpop.permute.xlu0 %329
        %331 = vrot.lane.b32.xlu0 %v321, 127
        %v332 = vpop.permute.xlu0 %331
        %333 = vrot.lane.b32.xlu0 %v323, 127
        %v334 = vpop.permute.xlu0 %333
        %vm335 = vcmask 1039360
        %v336 = vsel %vm335, %v330, %v332
        %v337 = vsel %vm335, %v332, %v334
        %vm338 = vcmask 97280
        %v340 = vsel %vm338, %v325, 0
        %vm342 = vcmask 1045504
        %v344 = vsel %vm342, %v336, 0
        %v347 = vsel %vm342, %v337, 0
        %v350 = vsel %vm342, %v334, 0
        %352 = vmatprep.subr.bf16.mxu0 0
        %353 = vmatpush1.bf16.msra.mxu0 0
        %354 = vmatprep.subr.bf16.mxu0 0
        %355 = vmatpush1.bf16.msra.mxu0 0
        %356 = vmatprep.subr.bf16.mxu0 0
        %357 = vmatpush1.bf16.msra.mxu0 0
        %358 = vmatprep.subr.bf16.mxu0 0
        %359 = vmatpush1.bf16.msra.mxu0 0
        %360 = vmatprep.subr.bf16.mxu0 0
        %361 = vmatpush1.bf16.msra.mxu0 0
        %362 = vmatprep.subr.bf16.mxu0 0
        %363 = vmatpush1.bf16.msra.mxu0 0
        %364 = vmatprep.subr.bf16.mxu0 0
        %365 = vmatpush1.bf16.msra.mxu0 0
        %366 = vmatprep.subr.bf16.mxu0 %v347
        %367 = vmatpush1.bf16.msra.mxu0 %v344
        %368 = vmatprep.subr.bf16.mxu0 0
        %369 = vmatpush2.bf16.msra.mxu0 0
        %370 = vmatprep.subr.bf16.mxu0 0
        %371 = vmatpush2.bf16.msra.mxu0 0
        %372 = vmatprep.subr.bf16.mxu0 0
        %373 = vmatpush2.bf16.msra.mxu0 0
        %374 = vmatprep.subr.bf16.mxu0 0
        %375 = vmatpush2.bf16.msra.mxu0 0
        %376 = vmatprep.subr.bf16.mxu0 0
        %377 = vmatpush2.bf16.msra.mxu0 0
        %378 = vmatprep.subr.bf16.mxu0 0
        %379 = vmatpush2.bf16.msra.mxu0 0
        %380 = vmatprep.subr.bf16.mxu0 0
        %381 = vmatpush2.bf16.msra.mxu0 0
        %382 = vmatprep.subr.bf16.mxu0 0
        %383 = vmatpush2.bf16.msra.mxu0 0
        %384 = vmatprep.mubr.bf16.mxu0 0
        %385 = vmatmul.mubr.bf16.gmra.mxu0 %v340
        %v386 = vpop.f32.mrf.mxu0
        %v387 = vadd.f32 0.0, %v386
        %v388 = vpop.f32.mrf.mxu0
        %v389 = vadd.f32 0.0, %v388
        %v390 = vpop.f32.mrf.mxu0
        %v391 = vpop.f32.mrf.mxu0
        %392 = vdwg.mxu0
        %393 = vmatprep.subr.bf16.mxu0 0
        %394 = vmatpush1.bf16.msra.mxu0 0
        %395 = vmatprep.subr.bf16.mxu0 0
        %396 = vmatpush1.bf16.msra.mxu0 0
        %397 = vmatprep.subr.bf16.mxu0 0
        %398 = vmatpush1.bf16.msra.mxu0 0
        %399 = vmatprep.subr.bf16.mxu0 0
        %400 = vmatpush1.bf16.msra.mxu0 0
        %401 = vmatprep.subr.bf16.mxu0 0
        %402 = vmatpush1.bf16.msra.mxu0 0
        %403 = vmatprep.subr.bf16.mxu0 0
        %404 = vmatpush1.bf16.msra.mxu0 0
        %405 = vmatprep.subr.bf16.mxu0 0
        %406 = vmatpush1.bf16.msra.mxu0 0
        %407 = vmatprep.subr.bf16.mxu0 0
        %408 = vmatpush1.bf16.msra.mxu0 %v350
        %409 = vmatprep.subr.bf16.mxu0 0
        %410 = vmatpush2.bf16.msra.mxu0 0
        %411 = vmatprep.subr.bf16.mxu0 0
        %412 = vmatpush2.bf16.msra.mxu0 0
        %413 = vmatprep.subr.bf16.mxu0 0
        %414 = vmatpush2.bf16.msra.mxu0 0
        %415 = vmatprep.subr.bf16.mxu0 0
        %416 = vmatpush2.bf16.msra.mxu0 0
        %417 = vmatprep.subr.bf16.mxu0 0
        %418 = vmatpush2.bf16.msra.mxu0 0
        %419 = vmatprep.subr.bf16.mxu0 0
        %420 = vmatpush2.bf16.msra.mxu0 0
        %421 = vmatprep.subr.bf16.mxu0 0
        %422 = vmatpush2.bf16.msra.mxu0 0
        %423 = vmatprep.subr.bf16.mxu0 0
        %424 = vmatpush2.bf16.msra.mxu0 0
        %425 = vmatprep.mubr.bf16.mxu0 0
        %426 = vmatmul.mubr.bf16.gmra.mxu0 %v340
        %v427 = vpop.f32.mrf.mxu0
        %v428 = vadd.f32 0.0, %v427
        %v429 = vpop.f32.mrf.mxu0
        %v430 = vpop.f32.mrf.mxu0
        %v431 = vpop.f32.mrf.mxu0
        %432 = vdwg.mxu0
        %v434 = vsel %vm338, %v260, 0
        %v436 = vsel %vm342, %v319, 0
        %v438 = vsel %vm342, %v321, 0
        %v440 = vsel %vm342, %v323, 0
        %442 = vmatprep.subr.bf16.mxu0 0
        %443 = vmatpush1.bf16.msra.mxu0 0
        %444 = vmatprep.subr.bf16.mxu0 0
        %445 = vmatpush1.bf16.msra.mxu0 0
        %446 = vmatprep.subr.bf16.mxu0 0
        %447 = vmatpush1.bf16.msra.mxu0 0
        %448 = vmatprep.subr.bf16.mxu0 0
        %449 = vmatpush1.bf16.msra.mxu0 0
        %450 = vmatprep.subr.bf16.mxu0 0
        %451 = vmatpush1.bf16.msra.mxu0 0
        %452 = vmatprep.subr.bf16.mxu0 0
        %453 = vmatpush1.bf16.msra.mxu0 0
        %454 = vmatprep.subr.bf16.mxu0 0
        %455 = vmatpush1.bf16.msra.mxu0 0
        %456 = vmatprep.subr.bf16.mxu0 %v438
        %457 = vmatpush1.bf16.msra.mxu0 %v436
        %458 = vmatprep.subr.bf16.mxu0 0
        %459 = vmatpush2.bf16.msra.mxu0 0
        %460 = vmatprep.subr.bf16.mxu0 0
        %461 = vmatpush2.bf16.msra.mxu0 0
        %462 = vmatprep.subr.bf16.mxu0 0
        %463 = vmatpush2.bf16.msra.mxu0 0
        %464 = vmatprep.subr.bf16.mxu0 0
        %465 = vmatpush2.bf16.msra.mxu0 0
        %466 = vmatprep.subr.bf16.mxu0 0
        %467 = vmatpush2.bf16.msra.mxu0 0
        %468 = vmatprep.subr.bf16.mxu0 0
        %469 = vmatpush2.bf16.msra.mxu0 0
        %470 = vmatprep.subr.bf16.mxu0 0
        %471 = vmatpush2.bf16.msra.mxu0 0
        %472 = vmatprep.subr.bf16.mxu0 0
        %473 = vmatpush2.bf16.msra.mxu0 0
        %474 = vmatprep.mubr.bf16.mxu0 0
        %475 = vmatmul.mubr.bf16.gmra.mxu0 %v434
        %v476 = vpop.f32.mrf.mxu0
        %v477 = vadd.f32 %v387, %v476
        %v478 = vpop.f32.mrf.mxu0
        %v479 = vadd.f32 %v389, %v478
        %v480 = vpop.f32.mrf.mxu0
        %v481 = vpop.f32.mrf.mxu0
        %482 = vdwg.mxu0
        %483 = vmatprep.subr.bf16.mxu0 0
        %484 = vmatpush1.bf16.msra.mxu0 0
        %485 = vmatprep.subr.bf16.mxu0 0
        %486 = vmatpush1.bf16.msra.mxu0 0
        %487 = vmatprep.subr.bf16.mxu0 0
        %488 = vmatpush1.bf16.msra.mxu0 0
        %489 = vmatprep.subr.bf16.mxu0 0
        %490 = vmatpush1.bf16.msra.mxu0 0
        %491 = vmatprep.subr.bf16.mxu0 0
        %492 = vmatpush1.bf16.msra.mxu0 0
        %493 = vmatprep.subr.bf16.mxu0 0
        %494 = vmatpush1.bf16.msra.mxu0 0
        %495 = vmatprep.subr.bf16.mxu0 0
        %496 = vmatpush1.bf16.msra.mxu0 0
        %497 = vmatprep.subr.bf16.mxu0 0
        %498 = vmatpush1.bf16.msra.mxu0 %v440
        %499 = vmatprep.subr.bf16.mxu0 0
        %500 = vmatpush2.bf16.msra.mxu0 0
        %501 = vmatprep.subr.bf16.mxu0 0
        %502 = vmatpush2.bf16.msra.mxu0 0
        %503 = vmatprep.subr.bf16.mxu0 0
        %504 = vmatpush2.bf16.msra.mxu0 0
        %505 = vmatprep.subr.bf16.mxu0 0
        %506 = vmatpush2.bf16.msra.mxu0 0
        %507 = vmatprep.subr.bf16.mxu0 0
        %508 = vmatpush2.bf16.msra.mxu0 0
        %509 = vmatprep.subr.bf16.mxu0 0
        %510 = vmatpush2.bf16.msra.mxu0 0
        %511 = vmatprep.subr.bf16.mxu0 0
        %512 = vmatpush2.bf16.msra.mxu0 0
        %513 = vmatprep.subr.bf16.mxu0 0
        %514 = vmatpush2.bf16.msra.mxu0 0
        %515 = vmatprep.mubr.bf16.mxu0 0
        %516 = vmatmul.mubr.bf16.gmra.mxu0 %v434
        %v517 = vpop.f32.mrf.mxu0
        %v518 = vadd.f32 %v428, %v517
        %v519 = vpop.f32.mrf.mxu0
        %v520 = vpop.f32.mrf.mxu0
        %v521 = vpop.f32.mrf.mxu0
        %522 = vdwg.mxu0
        %s523 = scalar_lea.vmem %s1, 8
        %v524 = vld [vmem:[%s523] sm:$0xf]
        %525 = vrot.lane.b32.xlu0 %v319, 126
        %v526 = vpop.permute.xlu0 %525
        %527 = vrot.lane.b32.xlu0 %v321, 126
        %v528 = vpop.permute.xlu0 %527
        %529 = vrot.lane.b32.xlu0 %v323, 126
        %v530 = vpop.permute.xlu0 %529
        %vm531 = vcmask 1031168
        %v532 = vsel %vm531, %v526, %v528
        %v533 = vsel %vm531, %v528, %v530
        %v535 = vsel %vm338, %v524, 0
        %v538 = vsel %vm342, %v532, 0
        %v541 = vsel %vm342, %v533, 0
        %v544 = vsel %vm342, %v530, 0
        %546 = vmatprep.subr.bf16.mxu0 0
        %547 = vmatpush1.bf16.msra.mxu0 0
        %548 = vmatprep.subr.bf16.mxu0 0
        %549 = vmatpush1.bf16.msra.mxu0 0
        %550 = vmatprep.subr.bf16.mxu0 0
        %551 = vmatpush1.bf16.msra.mxu0 0
        %552 = vmatprep.subr.bf16.mxu0 0
        %553 = vmatpush1.bf16.msra.mxu0 0
        %554 = vmatprep.subr.bf16.mxu0 0
        %555 = vmatpush1.bf16.msra.mxu0 0
        %556 = vmatprep.subr.bf16.mxu0 0
        %557 = vmatpush1.bf16.msra.mxu0 0
        %558 = vmatprep.subr.bf16.mxu0 0
        %559 = vmatpush1.bf16.msra.mxu0 0
        %560 = vmatprep.subr.bf16.mxu0 %v541
        %561 = vmatpush1.bf16.msra.mxu0 %v538
        %562 = vmatprep.subr.bf16.mxu0 0
        %563 = vmatpush2.bf16.msra.mxu0 0
        %564 = vmatprep.subr.bf16.mxu0 0
        %565 = vmatpush2.bf16.msra.mxu0 0
        %566 = vmatprep.subr.bf16.mxu0 0
        %567 = vmatpush2.bf16.msra.mxu0 0
        %568 = vmatprep.subr.bf16.mxu0 0
        %569 = vmatpush2.bf16.msra.mxu0 0
        %570 = vmatprep.subr.bf16.mxu0 0
        %571 = vmatpush2.bf16.msra.mxu0 0
        %572 = vmatprep.subr.bf16.mxu0 0
        %573 = vmatpush2.bf16.msra.mxu0 0
        %574 = vmatprep.subr.bf16.mxu0 0
        %575 = vmatpush2.bf16.msra.mxu0 0
        %576 = vmatprep.subr.bf16.mxu0 0
        %577 = vmatpush2.bf16.msra.mxu0 0
        %578 = vmatprep.mubr.bf16.mxu0 0
        %579 = vmatmul.mubr.bf16.gmra.mxu0 %v535
        %v580 = vpop.f32.mrf.mxu0
        %v581 = vadd.f32 0.0, %v580
        %v582 = vpop.f32.mrf.mxu0
        %v583 = vadd.f32 0.0, %v582
        %v584 = vpop.f32.mrf.mxu0
        %v585 = vpop.f32.mrf.mxu0
        %586 = vdwg.mxu0
        %587 = vmatprep.subr.bf16.mxu0 0
        %588 = vmatpush1.bf16.msra.mxu0 0
        %589 = vmatprep.subr.bf16.mxu0 0
        %590 = vmatpush1.bf16.msra.mxu0 0
        %591 = vmatprep.subr.bf16.mxu0 0
        %592 = vmatpush1.bf16.msra.mxu0 0
        %593 = vmatprep.subr.bf16.mxu0 0
        %594 = vmatpush1.bf16.msra.mxu0 0
        %595 = vmatprep.subr.bf16.mxu0 0
        %596 = vmatpush1.bf16.msra.mxu0 0
        %597 = vmatprep.subr.bf16.mxu0 0
        %598 = vmatpush1.bf16.msra.mxu0 0
        %599 = vmatprep.subr.bf16.mxu0 0
        %600 = vmatpush1.bf16.msra.mxu0 0
        %601 = vmatprep.subr.bf16.mxu0 0
        %602 = vmatpush1.bf16.msra.mxu0 %v544
        %603 = vmatprep.subr.bf16.mxu0 0
        %604 = vmatpush2.bf16.msra.mxu0 0
        %605 = vmatprep.subr.bf16.mxu0 0
        %606 = vmatpush2.bf16.msra.mxu0 0
        %607 = vmatprep.subr.bf16.mxu0 0
        %608 = vmatpush2.bf16.msra.mxu0 0
        %609 = vmatprep.subr.bf16.mxu0 0
        %610 = vmatpush2.bf16.msra.mxu0 0
        %611 = vmatprep.subr.bf16.mxu0 0
        %612 = vmatpush2.bf16.msra.mxu0 0
        %613 = vmatprep.subr.bf16.mxu0 0
        %614 = vmatpush2.bf16.msra.mxu0 0
        %615 = vmatprep.subr.bf16.mxu0 0
        %616 = vmatpush2.bf16.msra.mxu0 0
        %617 = vmatprep.subr.bf16.mxu0 0
        %618 = vmatpush2.bf16.msra.mxu0 0
        %619 = vmatprep.mubr.bf16.mxu0 0
        %620 = vmatmul.mubr.bf16.gmra.mxu0 %v535
        %v621 = vpop.f32.mrf.mxu0
        %v622 = vadd.f32 0.0, %v621
        %v623 = vpop.f32.mrf.mxu0
        %v624 = vpop.f32.mrf.mxu0
        %v625 = vpop.f32.mrf.mxu0
        %626 = vdwg.mxu0
        %v627 = vadd.f32 %v477, %v581
        %v628 = vadd.f32 %v479, %v583
        %v629 = vadd.f32 %v518, %v622
        %v630 = vld [vmem:[%s2] sm:$0xff]
        %632 = vset.pattern.permute.xlu0 0
        %633 = vperm.xlu0 %632, %v630
        %v634 = vpop.permute.xlu0 %633
        %v636 = vadd.f32 %v627, %v634
        %v637 = vadd.f32 %v628, %v634
        %v638 = vadd.f32 %v629, %v634
        %v639 = vmul.f32 %v636, %v636
        %v640 = vmul.f32 %v637, %v637
        %v641 = vmul.f32 %v638, %v638
        %v642 = vrot.slane %v639, 4
        %v643 = vadd.f32 %v639, %v642
        %v644 = vrot.slane %v643, 2
        %v645 = vadd.f32 %v643, %v644
        %v646 = vrot.slane %v645, 1
        %v647 = vadd.f32 %v645, %v646
        %v648 = vrot.slane %v640, 4
        %v649 = vadd.f32 %v640, %v648
        %v650 = vrot.slane %v649, 2
        %v651 = vadd.f32 %v649, %v650
        %v652 = vrot.slane %v651, 1
        %v653 = vadd.f32 %v651, %v652
        %vm654 = vcmask 261120
        %v655 = vsel %vm654, %v641, 0.0
        %v656 = vrot.slane %v655, 4
        %v657 = vadd.f32 %v655, %v656
        %v658 = vrot.slane %v657, 2
        %v659 = vadd.f32 %v657, %v658
        %v660 = vrot.slane %v659, 1
        %v661 = vadd.f32 %v659, %v660
        %v662 = vmax.f32 %v647, 1e-24
        %v663 = vmax.f32 %v653, 1e-24
        %v664 = vmax.f32 %v661, 1e-24
        %v665 = vrsqrt.pop %v662
        %v666 = vrsqrt.pop %v663
        %v667 = vrsqrt.pop %v664
        %v668 = vmul.f32 %v636, %v665
        %v669 = vmul.f32 %v637, %v666
        %v670 = vmul.f32 %v638, %v667
        %v671 = vld [vmem:[%s252] sm:$0xff]
        %673 = vset.pattern.permute.xlu0 0
        %674 = vperm.xlu0 %673, %v671
        %v675 = vpop.permute.xlu0 %674
        %v677 = vmul.f32 %v668, %v675
        %v678 = vmul.f32 %v669, %v675
        %v679 = vmul.f32 %v670, %v675
        %v680 = vld [vmem:[%s256] sm:$0xff]
        %682 = vset.pattern.permute.xlu0 0
        %683 = vperm.xlu0 %682, %v680
        %v684 = vpop.permute.xlu0 %683
        %v686 = vadd.f32 %v677, %v684
        %v687 = vadd.f32 %v678, %v684
        %v688 = vadd.f32 %v679, %v684
        %v689 = vpack.c.bf16 %v686, %v686
        %v690 = vpack.c.bf16 %v687, %v687
        %v691 = vpack.c.bf16 %v688, %v688
        %v692 = vxor.u32 %v689, 2147516416
        %v693 = vxor.u32 %v690, 2147516416
        %v694 = vxor.u32 %v691, 2147516416
        %v696 = vmul.bf16 %v692, 1069105081
        %v697 = vpow.bf16.pop %v696
        %v699 = vmul.bf16 %v693, 1069105081
        %v700 = vpow.bf16.pop %v699
        %v702 = vmul.bf16 %v694, 1069105081
        %v703 = vpow.bf16.pop %v702
        %v704 = vadd.bf16 %v697, 1065369472
        %v705 = vadd.bf16 %v700, 1065369472
        %v706 = vadd.bf16 %v703, 1065369472
        %v707 = vrcp.bf16.pop %v704
        %v708 = vmul.bf16 1065369472, %v707
        %v709 = vrcp.bf16.pop %v705
        %v710 = vmul.bf16 1065369472, %v709
        %v711 = vrcp.bf16.pop %v706
        %v712 = vmul.bf16 1065369472, %v711
        %v713 = vunpack.c.l.bf16 %v708
        %v714 = vunpack.c.l.bf16 %v710
        %v715 = vunpack.c.l.bf16 %v712
        %v716 = vmul.f32 %v686, %v713
        %v717 = vmul.f32 %v687, %v714
        %v718 = vmul.f32 %v688, %v715
        %719 = vst [vmem:[%s243] sm:$0xff] %v716
        %720 = vst [vmem:[%s243 + $0x8] sm:$0xff] %v717
        %721 = vst.msk [vmem:[%s243 + $0x10] sm:$0xff] %vm654, %v718
        %s722 = sand.u32 %s147, 1
        %s723 = scalar_lea.sflag [#allocation3], %s722
        %s724 = sand.u32 %s147, 1
        %s725 = smul.addr %s724, 24
        %s726 = scalar_lea.vmem [#allocation2], %s725
        // Predicated region
        $region41: #{tpu_custom_call.1} parent=39 // pred_check
          %p727 = pneg %p157
        $region42: #{tpu_custom_call.1} parent=39 // pred_check_branch
          %729 = sbr.rel (%p727) target = $region44
        $region43: #{tpu_custom_call.1} parent=39 // pred_region
          %s731 = ssub.s32 384, 384
          %732 = vsyncadd %s723, %s731
          %s733 = smul.addr %s19, 3
          %s734 = smul.addr %s733, 128
          %s735 = scalar_lea.hbm %s5, %s734
          %s737 = sshll.u32 %s726, 4
          %s738 = int_to_ptr.vmem [resolvable:$true] %s737
          %740 = dma.vmem_to_hbm [thread:$0]  %s738, 384, %s735, %s723
        $region44: #{tpu_custom_call.1} parent=39 // pred_fallthru
          _
      $region40: #{tpu_custom_call.1} parent=5 // pred_fallthru
        _
      %p741 = scmp.le.s32.totalorder 2, %s14
      // Predicated region
      $region45: #{tpu_custom_call.1} parent=5 // pred_check
        %p742 = pneg %p741
      $region46: #{tpu_custom_call.1} parent=5 // pred_check_branch
        %744 = sbr.rel (%p742) target = $region48
      $region47: #{tpu_custom_call.1} parent=5 // pred_region
        %s745 = ssub.s32 %s14, 2
        // Predicated region
        $region49: #{tpu_custom_call.1} parent=47 // pred_check
          %p746 = pneg %p163
        $region50: #{tpu_custom_call.1} parent=47 // pred_check_branch
          %748 = sbr.rel (%p746) target = $region52
        $region51: #{tpu_custom_call.1} parent=47 // pred_region
          %s749 = sand.u32 %s148, 1
          %s750 = scalar_lea.sflag [#allocation3], %s749
          %s751 = sand.u32 %s148, 1
          %s752 = smul.addr %s751, 24
          %s753 = scalar_lea.vmem [#allocation2], %s752
          %754 = dma.done %s750, 384
        $region52: #{tpu_custom_call.1} parent=47 // pred_fallthru
          _
      $region48: #{tpu_custom_call.1} parent=5 // pred_fallthru
        _
    $region6: #{tpu_custom_call.1} parent=1 // loop_footer
      %s18 = sadd.s32 1, %s14
    $region7: #{tpu_custom_call.1} parent=1 // loop_footer_branch
      %13 = sbr.rel target = $region3
    $region8: #{tpu_custom_call.1} parent=1 // loop_exit
      _
    %755 = vsyncpa [#allocation3], 1
    %s756 = scalar_lea.sflag [#allocation3], 1
    %757 = vsyncpa %s756, 1

</llo_original>
